<compile_context>
chip_gen: v6e
topology: v6e:2x2x1
jax: 0.10.0
libtpu: 0.0.40
codegen_flags: <defaults>
</compile_context>

<pallas_src>
import jax
import jax.numpy as jnp
from jax import lax
from jax.experimental import pallas as pl
from jax.experimental.pallas import tpu as pltpu


_EPS = 1e-08


def _round_up(x, m):
    return ((x + m - 1) // m) * m


def _tpu_vmem_capacity_bytes(default=64 * 1024 * 1024):
    """VMEM capacity of the local TPU generation (fallback: v7x's 64 MiB)."""
    try:
        cap = int(pltpu.get_tpu_info().vmem_capacity_bytes)
        if cap > 0:
            return cap
    except Exception:
        pass
    return default


def _vmem_plan():
    """(per-input-tile byte budget, scoped vmem_limit_bytes), generation-aware."""
    cap = _tpu_vmem_capacity_bytes()
    # ~1/8 of VMEM per input tile -> 2 inputs x 2 pipeline buffers ~= 1/2 VMEM.
    budget = min(max(cap // 8, 4 * 1024 * 1024), 16 * 1024 * 1024)
    # Explicit scoped limit: ~3/4 of physical VMEM (v5e/v6e default scoped
    # limits are far below their 128 MiB physical; v7x gets 48 MiB of 64 MiB).
    limit = int(min(max((cap * 3) // 4, 32 * 1024 * 1024), 100 * 1024 * 1024))
    return budget, limit


def _even_num_tiles(n_units, tile, align):
    """Best-effort: nudge `tile` so cdiv(n_units, tile) is even (v7x megacore)."""
    num_tiles = pl.cdiv(n_units, tile)
    if num_tiles > 1 and num_tiles % 2 == 1:
        cand = max(align, _round_up(pl.cdiv(n_units, num_tiles + 1), align))
        if pl.cdiv(n_units, cand) % 2 == 0:
            return cand
    return tile


# --------------------------------------------------------------------------
# Kernels
# --------------------------------------------------------------------------
def _make_lane_dense_kernel(tile_r, n_valid, needs_mask):
    """D == 1 fast path: elementwise loss on (tile_r, 128) lane-dense slabs."""

    def kernel(s_ref, p_ref, partial_ref):
        s = s_ref[...].astype(jnp.float32)      # (tile_r, 128)
        p = p_ref[...].astype(jnp.float32)      # (tile_r, 128)

        if needs_mask:
            # Mask flat positions >= true N (wrapper zero-pad and/or ragged
            # out-of-bounds block rows) BEFORE the logs so they can never
            # contribute or inject NaN.
            i = pl.program_id(0)
            row = lax.broadcasted_iota(jnp.int32, (tile_r, 128), 0)
            col = lax.broadcasted_iota(jnp.int32, (tile_r, 128), 1)
            flat = (i * tile_r + row) * 128 + col
            valid = flat < n_valid
            s = jnp.where(valid, s, jnp.float32(0.5))
            p = jnp.where(valid, p, jnp.float32(0.0))

        eps = jnp.float32(_EPS)
        loss = p * -jnp.log(s + eps) + (1.0 - p) * -jnp.log(1.0 - s + eps)

        if needs_mask:
            loss = jnp.where(valid, loss, jnp.float32(0.0))

        # Per-tile partial SUM, stored lane-dense via direct scalar broadcast.
        partial_ref[...] = jnp.broadcast_to(
            jnp.sum(loss).astype(jnp.float32), partial_ref.shape)

    return kernel


def _make_rowstrip_kernel(tile_n, n_rows, needs_mask):
    """General D >= 2 path: one (tile_n, D) row strip per grid step."""

    def kernel(out_ref, label_ref, partial_ref):
        # Fused-accumulation row reductions over the feature axis (lanes):
        # the bf16->f32 convert stays per-vreg inside the reduce (no full-tile
        # f32 upcast materialized in VMEM).
        s = jnp.sum(out_ref[...], axis=1, keepdims=True, dtype=jnp.float32)
        p = jnp.sum(label_ref[...], axis=1, keepdims=True, dtype=jnp.float32)

        if needs_mask:
            # Rows beyond the true N (ragged last tile): replace their sums
            # with safe constants BEFORE the logs, then zero their loss.
            i = pl.program_id(0)
            row = i * tile_n + lax.broadcasted_iota(jnp.int32, (tile_n, 1), 0)
            valid = row < n_rows
            s = jnp.where(valid, s, jnp.float32(0.5))
            p = jnp.where(valid, p, jnp.float32(0.0))

        eps = jnp.float32(_EPS)
        loss = p * -jnp.log(s + eps) + (1.0 - p) * -jnp.log(1.0 - s + eps)

        if needs_mask:
            loss = jnp.where(valid, loss, jnp.float32(0.0))

        partial_ref[...] = jnp.broadcast_to(
            jnp.sum(loss).astype(jnp.float32), partial_ref.shape)

    return kernel


# --------------------------------------------------------------------------
# Wrappers
# --------------------------------------------------------------------------
def _finish_mean(partials, n):
    # Finish the mean with the true N (correct for ragged / multi tiles).
    return jnp.sum(partials[:, 0, 0]) / jnp.float32(n)


def _sig_loss_d1(out, label, n, budget_bytes, vmem_limit, max_tile_rows):
    """Lane-dense fast path for D == 1: (N,1) columns viewed as (rows,128)."""
    s_flat = out.reshape(n)
    p_flat = label.reshape(n)
    rows = pl.cdiv(n, 128)
    n_pad = rows * 128
    if n_pad != n:
        # Cheap for the typical D==1 batch sizes; padded entries are masked
        # out inside the kernel, so the pad value never matters.
        s_flat = jnp.pad(s_flat, (0, n_pad - n))
        p_flat = jnp.pad(p_flat, (0, n_pad - n))
    s2 = s_flat.reshape(rows, 128)
    p2 = p_flat.reshape(rows, 128)

    # Budget by the f32 working set of a (tile_r, 128) slab.
    tile_r = budget_bytes // (128 * 4)
    if max_tile_rows is not None:
        tile_r = min(tile_r, max(1, pl.cdiv(max_tile_rows, 128)))
    if tile_r >= rows:
        tile_r = rows                       # block == full sublane extent
    else:
        tile_r = max(8, (tile_r // 8) * 8)  # (8, 128) layout constraint
    tile_r = _even_num_tiles(rows, tile_r, 8)
    num_tiles = pl.cdiv(rows, tile_r)
    needs_mask = (num_tiles * tile_r * 128) != n

    kernel = _make_lane_dense_kernel(tile_r, n, needs_mask)

    cost = pl.CostEstimate(
        flops=int(10 * n),
        transcendentals=int(2 * n),
        bytes_accessed=int(
            n_pad * (jnp.dtype(out.dtype).itemsize + jnp.dtype(label.dtype).itemsize)
            + num_tiles * 128 * 4),
    )

    partials = pl.pallas_call(
        kernel,
        out_shape=jax.ShapeDtypeStruct((num_tiles, 1, 128), jnp.float32),
        grid=(num_tiles,),
        in_specs=[
            pl.BlockSpec((tile_r, 128), lambda i: (i, 0)),
            pl.BlockSpec((tile_r, 128), lambda i: (i, 0)),
        ],
        out_specs=pl.BlockSpec((1, 1, 128), lambda i: (i, 0, 0)),
        compiler_params=pltpu.CompilerParams(
            dimension_semantics=("parallel",),
            vmem_limit_bytes=vmem_limit,
        ),
        cost_estimate=cost,
    )(s2, p2)

    return _finish_mean(partials, n)


def _sig_loss_general(out, label, n, d, budget_bytes, vmem_limit, max_tile_rows):
    """General D >= 2 path: streaming (tile_n, D) row strips."""
    # Real VMEM footprint: lane-padded feature width, f32-conservative bytes.
    d_pad = _round_up(d, 128)
    tile_n = budget_bytes // (d_pad * 4)
    if max_tile_rows is not None:
        tile_n = min(tile_n, max_tile_rows)
    if tile_n >= n:
        tile_n = n                          # single tile, block == full rows
    else:
        tile_n = max(8, (tile_n // 8) * 8)  # (8, 128) layout constraint
    tile_n = _even_num_tiles(n, tile_n, 8)
    num_tiles = pl.cdiv(n, tile_n)
    needs_mask = (n % tile_n) != 0

    kernel = _make_rowstrip_kernel(tile_n, n, needs_mask)

    cost = pl.CostEstimate(
        flops=int(2 * n * d + 10 * n),
        transcendentals=int(2 * n),
        bytes_accessed=int(
            n * d * (jnp.dtype(out.dtype).itemsize + jnp.dtype(label.dtype).itemsize)
            + num_tiles * 128 * 4),
    )

    partials = pl.pallas_call(
        kernel,
        out_shape=jax.ShapeDtypeStruct((num_tiles, 1, 128), jnp.float32),
        grid=(num_tiles,),
        in_specs=[
            pl.BlockSpec((tile_n, d), lambda i: (i, 0)),
            pl.BlockSpec((tile_n, d), lambda i: (i, 0)),
        ],
        out_specs=pl.BlockSpec((1, 1, 128), lambda i: (i, 0, 0)),
        compiler_params=pltpu.CompilerParams(
            dimension_semantics=("parallel",),
            vmem_limit_bytes=vmem_limit,
        ),
        cost_estimate=cost,
    )(out, label)

    return _finish_mean(partials, n)


def sig_loss(out, label, *, max_tile_rows=None):
    """out, label: (N, D) arrays (f32 or bf16). Returns scalar f32 loss."""
    assert out.shape == label.shape and out.ndim == 2
    n, d = out.shape
    budget_bytes, vmem_limit = _vmem_plan()
    if d == 1:
        return _sig_loss_d1(out, label, n, budget_bytes, vmem_limit, max_tile_rows)
    # TODO(synk): 2 <= D < 128 still runs the (tile_n, 1) tail math; a
    # sublane->lane relayout fast path could also help there.
    return _sig_loss_general(out, label, n, d, budget_bytes, vmem_limit,
                             max_tile_rows)


def sig_loss_ref(out, label):
    """Pure-JAX reference for correctness checking."""
    s = jnp.sum(out.astype(jnp.float32), axis=1)
    p = jnp.sum(label.astype(jnp.float32), axis=1)
    loss = p * -jnp.log(s + _EPS) + (1.0 - p) * -jnp.log(1.0 - s + _EPS)
    return jnp.mean(loss)


if __name__ == "__main__":
    key = jax.random.PRNGKey(0)

    def make_inputs(k, n, d, dtype):
        k_out, k_lab = jax.random.split(k)
        # Keep row sums of `out` strictly inside (0, 1) so both logs are
        # defined, matching the probability-like usage of the module.
        out = (jax.random.uniform(k_out, (n, d), dtype=jnp.float32)
               * (0.9 / d) + (0.05 / d)).astype(dtype)
        # Labels whose row sums p are 0 or 1 (one-hot-ish per sample).
        hot = jax.random.randint(k_lab, (n,), 0, d)
        is_pos = (jnp.arange(n) % 2 == 0).astype(jnp.float32)
        label = (jax.nn.one_hot(hot, d, dtype=jnp.float32)
                 * is_pos[:, None]).astype(dtype)
        return out, label

    cases = [
        dict(n=10, d=1, dtype=jnp.float32, max_tile_rows=None),     # D==1 fast path, ragged
        dict(n=2100, d=1, dtype=jnp.float32, max_tile_rows=1024),   # D==1, multi-tile + mask
        dict(n=8, d=32, dtype=jnp.float32, max_tile_rows=None),     # exact single tile
        dict(n=20, d=32, dtype=jnp.float32, max_tile_rows=8),       # multi-tile + ragged
        dict(n=16, d=64, dtype=jnp.bfloat16, max_tile_rows=8),      # bf16, 2 even tiles
    ]
    keys = jax.random.split(key, len(cases))
    for k, c in zip(keys, cases):
        out, label = make_inputs(k, c["n"], c["d"], c["dtype"])
        loss = sig_loss(out, label, max_tile_rows=c["max_tile_rows"])
        jax.block_until_ready(loss)
        ref = sig_loss_ref(out, label)
        assert jnp.allclose(loss, ref, rtol=1e-5, atol=1e-6), (c, loss, ref)

    print("KERNEL_OK")
</pallas_src>

<mosaic_0001>
module attributes {stable_mosaic.version = 11 : i64} {
  func.func @kernel(%arg0: i32, %arg1: memref<1x128xf32, #tpu.memory_space<vmem>>, %arg2: memref<1x128xf32, #tpu.memory_space<vmem>>, %arg3: memref<1x1x128xf32, #tpu.memory_space<vmem>>) attributes {dimension_semantics = [#tpu.dimension_semantics<parallel>], iteration_bounds = array<i64: 1>, scalar_prefetch = 0 : i64, scratch_operands = 0 : i64, tpu.core_type = #tpu.core_type<tc>, window_params = [{transform_indices = @transform_0, window_bounds = array<i64: 1, 128>}, {transform_indices = @transform_1, window_bounds = array<i64: 1, 128>}, {transform_indices = @transform_2, window_bounds = array<i64: 1, 1, 128>}]} {
    %c0 = arith.constant 0 : index
    %c0_0 = arith.constant 0 : index
    %0 = vector.load %arg1[%c0, %c0_0] : memref<1x128xf32, #tpu.memory_space<vmem>>, vector<1x128xf32>
    %c0_1 = arith.constant 0 : index
    %c0_2 = arith.constant 0 : index
    %1 = vector.load %arg2[%c0_1, %c0_2] : memref<1x128xf32, #tpu.memory_space<vmem>>, vector<1x128xf32>
    %2 = tpu.iota {dimensions = array<i32: 0>} : vector<1x128xi32>
    %3 = tpu.iota {dimensions = array<i32: 1>} : vector<1x128xi32>
    %c1_i32 = arith.constant 1 : i32
    %4 = arith.muli %arg0, %c1_i32 : i32
    %5 = vector.broadcast %4 : i32 to vector<1x128xi32>
    %6 = arith.addi %5, %2 : vector<1x128xi32>
    %c128_i32 = arith.constant 128 : i32
    %7 = vector.broadcast %c128_i32 : i32 to vector<1x128xi32>
    %8 = arith.muli %6, %7 : vector<1x128xi32>
    %9 = arith.addi %8, %3 : vector<1x128xi32>
    %c10_i32 = arith.constant 10 : i32
    %10 = vector.broadcast %c10_i32 : i32 to vector<1x128xi32>
    %11 = arith.cmpi slt, %9, %10 : vector<1x128xi32>
    %cst = arith.constant 5.000000e-01 : f32
    %12 = vector.broadcast %cst : f32 to vector<1x128xf32>
    %13 = arith.select %11, %0, %12 : vector<1x128xi1>, vector<1x128xf32>
    %cst_3 = arith.constant 0.000000e+00 : f32
    %14 = vector.broadcast %cst_3 : f32 to vector<1x128xf32>
    %15 = arith.select %11, %1, %14 : vector<1x128xi1>, vector<1x128xf32>
    %cst_4 = arith.constant 9.99999993E-9 : f32
    %16 = vector.broadcast %cst_4 : f32 to vector<1x128xf32>
    %17 = arith.addf %13, %16 : vector<1x128xf32>
    %18 = math.log %17 : vector<1x128xf32>
    %cst_5 = arith.constant 0.000000e+00 : f32
    %19 = vector.broadcast %cst_5 : f32 to vector<1x128xf32>
    %20 = arith.subf %19, %18 : vector<1x128xf32>
    %21 = arith.mulf %15, %20 : vector<1x128xf32>
    %cst_6 = arith.constant 1.000000e+00 : f32
    %22 = vector.broadcast %cst_6 : f32 to vector<1x128xf32>
    %23 = arith.subf %22, %15 : vector<1x128xf32>
    %cst_7 = arith.constant 1.000000e+00 : f32
    %24 = vector.broadcast %cst_7 : f32 to vector<1x128xf32>
    %25 = arith.subf %24, %13 : vector<1x128xf32>
    %cst_8 = arith.constant 9.99999993E-9 : f32
    %26 = vector.broadcast %cst_8 : f32 to vector<1x128xf32>
    %27 = arith.addf %25, %26 : vector<1x128xf32>
    %28 = math.log %27 : vector<1x128xf32>
    %cst_9 = arith.constant 0.000000e+00 : f32
    %29 = vector.broadcast %cst_9 : f32 to vector<1x128xf32>
    %30 = arith.subf %29, %28 : vector<1x128xf32>
    %31 = arith.mulf %23, %30 : vector<1x128xf32>
    %32 = arith.addf %21, %31 : vector<1x128xf32>
    %cst_10 = arith.constant 0.000000e+00 : f32
    %33 = vector.broadcast %cst_10 : f32 to vector<1x128xf32>
    %34 = arith.select %11, %32, %33 : vector<1x128xi1>, vector<1x128xf32>
    %35 = vector.shape_cast %34 : vector<1x128xf32> to vector<1x1x128xf32>
    %cst_11 = arith.constant dense<0.000000e+00> : vector<1xf32>
    %36 = vector.multi_reduction <add>, %35, %cst_11 [1, 2] : vector<1x1x128xf32> to vector<1xf32>
    %37 = vector.shape_cast %36 : vector<1xf32> to vector<1x1x1xf32>
    %38 = vector.extract %37[0, 0, 0] : f32 from vector<1x1x1xf32>
    %39 = vector.broadcast %38 : f32 to vector<1x1x128xf32>
    %c0_12 = arith.constant 0 : index
    %c0_13 = arith.constant 0 : index
    %c0_14 = arith.constant 0 : index
    %40 = vector.load %arg3[%c0_12, %c0_13, %c0_14] : memref<1x1x128xf32, #tpu.memory_space<vmem>>, vector<1x1x128xf32>
    tpu.vector_store %arg3[%c0_12, %c0_13, %c0_14], %39 {strides = array<i32>} : memref<1x1x128xf32, #tpu.memory_space<vmem>>, vector<1x1x128xf32>,
    return
  }
  func.func @transform_0(%arg0: i32) -> (i32, i32) {
    %c0_i32 = arith.constant 0 : i32
    %c0_i32_0 = arith.constant 0 : i32
    return %arg0, %c0_i32 : i32, i32
  }
  func.func @transform_1(%arg0: i32) -> (i32, i32) {
    %c0_i32 = arith.constant 0 : i32
    %c0_i32_0 = arith.constant 0 : i32
    return %arg0, %c0_i32 : i32, i32
  }
  func.func @transform_2(%arg0: i32) -> (i32, i32, i32) {
    %c0_i32 = arith.constant 0 : i32
    %c0_i32_0 = arith.constant 0 : i32
    %c0_i32_1 = arith.constant 0 : i32
    return %arg0, %c0_i32, %c0_i32_0 : i32, i32, i32
  }
}

</mosaic_0001>

<llo_original>
// kernel: tpu_custom_call.1
$region0: #{tpu_custom_call.1}
  #allocation0 [shape = 'u32[]', space=smem, size = 0x4, offset = 0x4, fixed_abs, tag = 'smem constant byte address 0x4 - core index']
  #allocation1 [shape = 'u32[144,128]{1,0:T(1,128)}', space=vmem, size = 0x12000, scoped, tag = 'internal scratch']
  %s0 = inlined_call_operand.hbm [shape: f32[1,128], index: 0, kind: input, shape index: {}]
  %s1 = inlined_call_operand.vmem [shape: f32[1,128], index: 1, kind: input, shape index: {}]
  %s2 = inlined_call_operand.hbm [shape: f32[1,1,128], index: 2, kind: output, shape index: {}]
  %s3 = sld [smem:[#allocation0]]
  $region22: #{tpu_custom_call.1} parent=0
    _
  %s5 = ssub.s32 1, %s3
  %s6 = scalar_select 0, %s5, %s3
  $region1: #{tpu_custom_call.1} parent=0
    #allocation2 [shape = 'u8[512]{0}', space=vmem, size = 0x400, scoped, tag = 'input window, operand 0, single buffered']
    #allocation3 [shape = 's32[1]{0}', space=sflag, size = 0x4, scoped, tag = 'scoped memory for tpu_custom_call.1']
    #allocation4 [shape = 's32[1]{0}', space=sflag, size = 0x4, scoped, tag = 'scoped memory for tpu_custom_call.1']
    #allocation5 [shape = 'u8[512]{0}', space=vmem, size = 0x400, scoped, tag = 'output window, operand 0, single buffered']
    %7 = vsyncpa [#allocation3], 0
    %8 = vsyncpa [#allocation4], 0
    // Predicated region
    $region2: #{tpu_custom_call.1} parent=1 // pred_check
      _
    $region3: #{tpu_custom_call.1} parent=1 // pred_check_branch
      %10 = sbr.rel (0) target = $region5
    $region4: #{tpu_custom_call.1} parent=1 // pred_region
      %s12 = ssub.s32 16, 16
      %13 = vsyncadd [#allocation3], %s12
      %s15 = sshll.u32 [#allocation2], 4
      %s16 = int_to_ptr.vmem [resolvable:$true] %s15
      %18 = dma.hbm_to_vmem [thread:$0]  %s0, 16, %s16, [#allocation3]
    $region5: #{tpu_custom_call.1} parent=1 // pred_fallthru
      _
    // Predicated region
    $region6: #{tpu_custom_call.1} parent=1 // pred_check
      _
    $region7: #{tpu_custom_call.1} parent=1 // pred_check_branch
      %20 = sbr.rel (0) target = $region9
    $region8: #{tpu_custom_call.1} parent=1 // pred_region
      _
    $region9: #{tpu_custom_call.1} parent=1 // pred_fallthru
      _
    // Predicated region
    $region10: #{tpu_custom_call.1} parent=1 // pred_check
      _
    $region11: #{tpu_custom_call.1} parent=1 // pred_check_branch
      %22 = sbr.rel (0) target = $region13
    $region12: #{tpu_custom_call.1} parent=1 // pred_region
      %23 = dma.done [#allocation3], 16
    $region13: #{tpu_custom_call.1} parent=1 // pred_fallthru
      _
    %v24 = vld [vmem:[#allocation2] sm:$0x1]
    %v25 = vld [vmem:[%s1] sm:$0x1]
    %v26 = vlaneseq
    %v27 = vshrl.u32 %v26, 7
    %v28 = vlaneseq
    %v29 = vand.u32 %v28, 127
    %v30 = vstv 0
    %v31 = vadd.s32 %v30, %v27
    %v32 = vmul.u32 %v31, 128
    %v33 = vadd.s32 %v32, %v29
    %vm34 = vcmp.lt.s32.totalorder %v33, 10
    %v35 = vsel %vm34, %v24, 0.5
    %v36 = vsel %vm34, %v25, 0.0
    %v37 = vadd.f32 %v35, 1e-08
    %v38 = vlog2.pop %v37
    %v39 = vmul.f32 %v38, 0.6931472
    %v40 = vsub.f32 0.0, %v39
    %v41 = vmul.f32 %v36, %v40
    %v42 = vsub.f32 1.0, %v36
    %v43 = vsub.f32 1.0, %v35
    %v44 = vadd.f32 %v43, 1e-08
    %v45 = vlog2.pop %v44
    %v46 = vmul.f32 %v45, 0.6931472
    %v47 = vsub.f32 0.0, %v46
    %v48 = vmul.f32 %v42, %v47
    %v49 = vadd.f32 %v41, %v48
    %v50 = vsel %vm34, %v49, 0.0
    %vm51 = vcmask 1040384
    %v52 = vsel %vm51, %v50, 0.0
    %53 = vadd.xlane.f32.xlu0 %v52
    %v54 = vpop.xlane.xlu0 %53
    %v55 = vrot.slane %v54, 4
    %v56 = vadd.f32 %v54, %v55
    %v57 = vrot.slane %v56, 2
    %v58 = vadd.f32 %v56, %v57
    %v59 = vrot.slane %v58, 1
    %v60 = vadd.f32 %v58, %v59
    %s61 = vtos %v60
    %v62 = vstv %s61
    %63 = vst [vmem:[#allocation5] sm:$0x1] %v62
    // Predicated region
    $region14: #{tpu_custom_call.1} parent=1 // pred_check
      _
    $region15: #{tpu_custom_call.1} parent=1 // pred_check_branch
      %65 = sbr.rel (0) target = $region17
    $region16: #{tpu_custom_call.1} parent=1 // pred_region
      %s67 = ssub.s32 16, 16
      %68 = vsyncadd [#allocation4], %s67
      %s70 = sshll.u32 [#allocation5], 4
      %s71 = int_to_ptr.vmem [resolvable:$true] %s70
      %73 = dma.vmem_to_hbm [thread:$0]  %s71, 16, %s2, [#allocation4]
    $region17: #{tpu_custom_call.1} parent=1 // pred_fallthru
      _
    // Predicated region
    $region18: #{tpu_custom_call.1} parent=1 // pred_check
      _
    $region19: #{tpu_custom_call.1} parent=1 // pred_check_branch
      %75 = sbr.rel (0) target = $region21
    $region20: #{tpu_custom_call.1} parent=1 // pred_region
      %76 = dma.done [#allocation4], 16
    $region21: #{tpu_custom_call.1} parent=1 // pred_fallthru
      _
    %77 = vsyncpa [#allocation3], 1
    %78 = vsyncpa [#allocation4], 1

</llo_original>
